<compile_context>
chip_gen: v7x
topology: tpu7x:2x2x1
jax: 0.10.0
libtpu: 0.0.40
codegen_flags: <defaults>
</compile_context>

<pallas_src>
import functools

import jax
import jax.numpy as jnp
from jax.experimental import pallas as pl
from jax.experimental.pallas import tpu as pltpu


def _round_up(x, m):
    return (x + m - 1) // m * m


def _sublane_align(dtype):
    itemsize = jnp.dtype(dtype).itemsize
    if itemsize >= 4:
        return 8
    if itemsize == 2:
        return 16
    return 32


def _choose_tile(dim, max_tile, align):
    """Pick (tile, padded_dim) for one GEMM dimension.

    * dim <= max_tile  -> single full-extent block (no padding, no alignment
      constraint since the block equals the full array dim).
    * else prefer the largest `align`-multiple tile dividing the
      `align`-rounded dim (avoids a full jnp.pad copy of the operand).
    * if that divisor would be pathologically small, fall back to padding the
      dim up to a multiple of the largest tile.
    """
    if dim <= max_tile:
        return dim, dim
    dim_al = _round_up(dim, align)
    cap = (min(max_tile, dim_al) // align) * align
    tile = align
    t = cap
    while t >= align:
        if dim_al % t == 0:
            tile = t
            break
        t -= align
    if tile * 4 < cap:           # divisor-only tiling too small -> pad instead
        tile = cap
        dim_al = _round_up(dim, tile)
    return tile, dim_al


def _fc_kernel_scratch(x_ref, w_ref, b_ref, o_ref, acc_ref):
    # x_ref: (tm, tk), w_ref: (tk, tn) [W already transposed], b_ref: (1, tn)
    # o_ref: (tm, tn), acc_ref: (tm, tn) f32 accumulator resident across K.
    k = pl.program_id(2)

    @pl.when(k == 0)
    def _():
        acc_ref[...] = jnp.zeros_like(acc_ref)

    acc_ref[...] += jnp.dot(x_ref[...], w_ref[...],
                            preferred_element_type=jnp.float32)

    @pl.when(k == pl.num_programs(2) - 1)
    def _():
        o_ref[...] = (acc_ref[...] + b_ref[...].astype(jnp.float32)
                      ).astype(o_ref.dtype)


def _fc_kernel_inplace(x_ref, w_ref, b_ref, o_ref):
    # f32 output: accumulate directly into the resident output tile
    # (saves tm*tn*4 bytes of VMEM and one per-tile copy).
    k = pl.program_id(2)

    @pl.when(k == 0)
    def _():
        o_ref[...] = jnp.zeros_like(o_ref)

    o_ref[...] += jnp.dot(x_ref[...], w_ref[...],
                          preferred_element_type=jnp.float32)

    @pl.when(k == pl.num_programs(2) - 1)
    def _():
        o_ref[...] += b_ref[...].astype(jnp.float32)


@functools.partial(jax.jit, static_argnames=("tm", "tn", "tk", "compute_dtype"))
def fc_forward(x, weight, bias, *, tm=512, tn=512, tk=1024, compute_dtype=None):
    """Equivalent of torch.nn.Linear(in_dim, out_dim)(x).

    x:      (..., in_dim)
    weight: (out_dim, in_dim)  -- PyTorch nn.Linear convention
    bias:   (out_dim,)
    compute_dtype: optional MXU operand dtype (e.g. jnp.bfloat16); output and
      accumulation stay in x.dtype / f32.
    """
    in_dim = x.shape[-1]
    out_dim = weight.shape[0]
    lead = x.shape[:-1]
    m = 1
    for d in lead:
        m *= d

    out_dtype = x.dtype
    cdtype = jnp.dtype(compute_dtype) if compute_dtype is not None else jnp.dtype(x.dtype)

    x2d = x.reshape(m, in_dim).astype(cdtype)
    # One-time transpose (single HBM pass over W), amortized over the M//tm
    # re-reads inside the kernel; gives the kernel a plain NN contraction.
    wT = weight.astype(cdtype).T                      # (in_dim, out_dim)
    b2d = bias.reshape(1, out_dim)

    sub = max(_sublane_align(cdtype), _sublane_align(out_dtype))
    tm_eff, m_pad = _choose_tile(max(m, 1), tm, sub)
    tk_eff, k_pad = _choose_tile(in_dim, tk, 128)
    tn_eff, n_pad = _choose_tile(out_dim, tn, 128)

    # v7x megacore: keep >=2 blocks on the parallel axes when cheaply possible.
    if m_pad // tm_eff == 1 and n_pad // tn_eff == 1 and tn_eff % 256 == 0:
        tn_eff //= 2

    if (m_pad != m) or (k_pad != in_dim):
        x2d = jnp.pad(x2d, ((0, m_pad - m), (0, k_pad - in_dim)))
    if (k_pad != in_dim) or (n_pad != out_dim):
        wT = jnp.pad(wT, ((0, k_pad - in_dim), (0, n_pad - out_dim)))
    if n_pad != out_dim:
        b2d = jnp.pad(b2d, ((0, 0), (0, n_pad - out_dim)))

    grid = (m_pad // tm_eff, n_pad // tn_eff, k_pad // tk_eff)

    inplace_f32 = jnp.dtype(out_dtype) == jnp.float32
    kernel = _fc_kernel_inplace if inplace_f32 else _fc_kernel_scratch
    scratch = [] if inplace_f32 else [pltpu.VMEM((tm_eff, tn_eff), jnp.float32)]

    x_bytes = jnp.dtype(cdtype).itemsize
    b_bytes = jnp.dtype(b2d.dtype).itemsize
    o_bytes = jnp.dtype(out_dtype).itemsize
    cost = pl.CostEstimate(
        flops=2 * m_pad * n_pad * k_pad,
        transcendentals=0,
        bytes_accessed=(m_pad * k_pad * x_bytes
                        + k_pad * n_pad * x_bytes
                        + n_pad * b_bytes
                        + m_pad * n_pad * o_bytes),
    )

    # Double-buffered tiles + accumulator, 2x headroom, capped at v7x's 64 MiB
    # physical VMEM (floor at the 32 MiB default scoped limit).
    vmem_need = (2 * tm_eff * tk_eff * x_bytes
                 + 2 * tk_eff * tn_eff * x_bytes
                 + 2 * tn_eff * b_bytes
                 + 2 * tm_eff * tn_eff * o_bytes
                 + (0 if inplace_f32 else tm_eff * tn_eff * 4))
    vmem_limit = max(32 << 20, min(2 * vmem_need + (2 << 20), 64 << 20))

    out2d = pl.pallas_call(
        kernel,
        out_shape=jax.ShapeDtypeStruct((m_pad, n_pad), out_dtype),
        grid_spec=pltpu.PrefetchScalarGridSpec(
            num_scalar_prefetch=0,
            grid=grid,
            in_specs=[
                pl.BlockSpec((tm_eff, tk_eff), lambda i, j, k: (i, k)),  # x
                pl.BlockSpec((tk_eff, tn_eff), lambda i, j, k: (k, j)),  # W.T
                pl.BlockSpec((1, tn_eff), lambda i, j, k: (0, j)),       # bias
            ],
            out_specs=pl.BlockSpec((tm_eff, tn_eff), lambda i, j, k: (i, j)),
            scratch_shapes=scratch,
        ),
        compiler_params=pltpu.CompilerParams(
            dimension_semantics=("parallel", "parallel", "arbitrary"),
            vmem_limit_bytes=vmem_limit,
        ),
        cost_estimate=cost,
    )(x2d, wT, b2d)

    if (m_pad != m) or (n_pad != out_dim):
        out2d = out2d[:m, :out_dim]
    return out2d.reshape(*lead, out_dim)


def init_fc_params(key, in_dim, out_dim, dtype=jnp.float32):
    """Deterministic nn.Linear-style init: U(-1/sqrt(in_dim), 1/sqrt(in_dim))."""
    kw, kb = jax.random.split(key)
    bound = 1.0 / (in_dim ** 0.5)
    weight = jax.random.uniform(kw, (out_dim, in_dim), dtype, -bound, bound)
    bias = jax.random.uniform(kb, (out_dim,), dtype, -bound, bound)
    return weight, bias


if __name__ == "__main__":
    key = jax.random.PRNGKey(0)
    k_x, k_p, k_x2, k_p2 = jax.random.split(key, 4)

    # --- test 1: small shapes matching the module's typical usage (f32) ---
    batch, seq, in_dim, out_dim = 2, 8, 32, 64
    x = jax.random.normal(k_x, (batch, seq, in_dim), dtype=jnp.float32)
    weight, bias = init_fc_params(k_p, in_dim, out_dim)

    y = fc_forward(x, weight, bias)
    jax.block_until_ready(y)
    y_ref = x @ weight.T + bias
    assert y.shape == (batch, seq, out_dim)
    assert jnp.allclose(y, y_ref, atol=1e-4, rtol=1e-4), (
        float(jnp.max(jnp.abs(y - y_ref))))

    # --- test 1b: same shapes, bf16 MXU operands (f32 accumulation/output) ---
    y_bf = fc_forward(x, weight, bias, compute_dtype=jnp.bfloat16)
    jax.block_until_ready(y_bf)
    assert jnp.allclose(y_bf, y_ref, atol=1e-1, rtol=1e-1), (
        float(jnp.max(jnp.abs(y_bf - y_ref))))

    # --- test 2: multi-tile grid (M, N, K all split; no padding needed) ---
    b2, s2, in2, out2 = 2, 272, 1152, 640
    x2 = jax.random.normal(k_x2, (b2, s2, in2), dtype=jnp.float32)
    weight2, bias2 = init_fc_params(k_p2, in2, out2)
    y2 = fc_forward(x2, weight2, bias2)
    jax.block_until_ready(y2)
    y2_ref = x2 @ weight2.T + bias2
    assert y2.shape == (b2, s2, out2)
    assert jnp.allclose(y2, y2_ref, atol=2e-3, rtol=2e-3), (
        float(jnp.max(jnp.abs(y2 - y2_ref))))

    print("KERNEL_OK")
</pallas_src>

<mosaic_0001>
module attributes {stable_mosaic.version = 11 : i64} {
  func.func @_fc_kernel_inplace(%arg0: i32, %arg1: i32, %arg2: i32, %arg3: memref<16x32xf32, #tpu.memory_space<vmem>>, %arg4: memref<32x64xf32, #tpu.memory_space<vmem>>, %arg5: memref<1x64xf32, #tpu.memory_space<vmem>>, %arg6: memref<16x64xf32, #tpu.memory_space<vmem>>) attributes {dimension_semantics = [#tpu.dimension_semantics<parallel>, #tpu.dimension_semantics<parallel>, #tpu.dimension_semantics<arbitrary>], iteration_bounds = array<i64: 1, 1, 1>, scalar_prefetch = 0 : i64, scratch_operands = 0 : i64, tpu.core_type = #tpu.core_type<tc>, window_params = [{transform_indices = @transform_0, window_bounds = array<i64: 16, 32>}, {transform_indices = @transform_1, window_bounds = array<i64: 32, 64>}, {transform_indices = @transform_2, window_bounds = array<i64: 1, 64>}, {transform_indices = @transform_3, window_bounds = array<i64: 16, 64>}]} {
    %c0_i32 = arith.constant 0 : i32
    %0 = arith.cmpi eq, %arg2, %c0_i32 : i32
    %1 = arith.extui %0 : i1 to i32
    %c0_i32_0 = arith.constant 0 : i32
    %2 = arith.cmpi ne, %1, %c0_i32_0 : i32
    scf.if %2 {
      %cst_10 = arith.constant 0.000000e+00 : f32
      %12 = vector.broadcast %cst_10 : f32 to vector<16x64xf32>
      %c0_11 = arith.constant 0 : index
      %c0_12 = arith.constant 0 : index
      %13 = vector.load %arg6[%c0_11, %c0_12] : memref<16x64xf32, #tpu.memory_space<vmem>>, vector<16x64xf32>
      tpu.vector_store %arg6[%c0_11, %c0_12], %12 {strides = array<i32>} : memref<16x64xf32, #tpu.memory_space<vmem>>, vector<16x64xf32>,
    } else {
    }
    %c0 = arith.constant 0 : index
    %c0_1 = arith.constant 0 : index
    %3 = vector.load %arg6[%c0, %c0_1] : memref<16x64xf32, #tpu.memory_space<vmem>>, vector<16x64xf32>
    %c0_2 = arith.constant 0 : index
    %c0_3 = arith.constant 0 : index
    %4 = vector.load %arg3[%c0_2, %c0_3] : memref<16x32xf32, #tpu.memory_space<vmem>>, vector<16x32xf32>
    %c0_4 = arith.constant 0 : index
    %c0_5 = arith.constant 0 : index
    %5 = vector.load %arg4[%c0_4, %c0_5] : memref<32x64xf32, #tpu.memory_space<vmem>>, vector<32x64xf32>
    %cst = arith.constant dense<0.000000e+00> : vector<16x64xf32>
    %6 = tpu.matmul %4, %5, %cst {dimension_numbers = #tpu.dot_dimension_numbers<[1], [0], [0], [1], [0, 0, 1, 1], [], []>} : vector<16x32xf32>, vector<32x64xf32>, vector<16x64xf32> -> vector<16x64xf32>
    %7 = arith.addf %3, %6 : vector<16x64xf32>
    %c0_6 = arith.constant 0 : index
    %c0_7 = arith.constant 0 : index
    %8 = vector.load %arg6[%c0_6, %c0_7] : memref<16x64xf32, #tpu.memory_space<vmem>>, vector<16x64xf32>
    tpu.vector_store %arg6[%c0_6, %c0_7], %7 {strides = array<i32>} : memref<16x64xf32, #tpu.memory_space<vmem>>, vector<16x64xf32>,
    %c0_i32_8 = arith.constant 0 : i32
    %9 = arith.cmpi eq, %arg2, %c0_i32_8 : i32
    %10 = arith.extui %9 : i1 to i32
    %c0_i32_9 = arith.constant 0 : i32
    %11 = arith.cmpi ne, %10, %c0_i32_9 : i32
    scf.if %11 {
      %c0_10 = arith.constant 0 : index
      %c0_11 = arith.constant 0 : index
      %12 = vector.load %arg6[%c0_10, %c0_11] : memref<16x64xf32, #tpu.memory_space<vmem>>, vector<16x64xf32>
      %c0_12 = arith.constant 0 : index
      %c0_13 = arith.constant 0 : index
      %13 = vector.load %arg5[%c0_12, %c0_13] : memref<1x64xf32, #tpu.memory_space<vmem>>, vector<1x64xf32>
      %14 = vector.broadcast %13 : vector<1x64xf32> to vector<16x64xf32>
      %15 = arith.addf %12, %14 : vector<16x64xf32>
      %c0_14 = arith.constant 0 : index
      %c0_15 = arith.constant 0 : index
      %16 = vector.load %arg6[%c0_14, %c0_15] : memref<16x64xf32, #tpu.memory_space<vmem>>, vector<16x64xf32>
      tpu.vector_store %arg6[%c0_14, %c0_15], %15 {strides = array<i32>} : memref<16x64xf32, #tpu.memory_space<vmem>>, vector<16x64xf32>,
    } else {
    }
    return
  }
  func.func @transform_0(%arg0: i32, %arg1: i32, %arg2: i32) -> (i32, i32) {
    %c0_i32 = arith.constant 0 : i32
    return %arg0, %arg2 : i32, i32
  }
  func.func @transform_1(%arg0: i32, %arg1: i32, %arg2: i32) -> (i32, i32) {
    %c0_i32 = arith.constant 0 : i32
    return %arg2, %arg1 : i32, i32
  }
  func.func @transform_2(%arg0: i32, %arg1: i32, %arg2: i32) -> (i32, i32) {
    %c0_i32 = arith.constant 0 : i32
    %c0_i32_0 = arith.constant 0 : i32
    return %c0_i32, %arg1 : i32, i32
  }
  func.func @transform_3(%arg0: i32, %arg1: i32, %arg2: i32) -> (i32, i32) {
    %c0_i32 = arith.constant 0 : i32
    return %arg0, %arg1 : i32, i32
  }
}

</mosaic_0001>

<llo_original>
// kernel: fc_forward.1
$region0: #{fc_forward.1}
  #allocation0 [shape = 'u32[]', space=smem, size = 0x4, offset = 0x4, fixed_abs, tag = 'smem constant byte address 0x4 - core index']
  #allocation1 [shape = 'u32[144,128]{1,0:T(1,128)}', space=vmem, size = 0x12000, scoped, tag = 'internal scratch']
  %s0 = inlined_call_operand.hbm [shape: f32[16,32], index: 0, kind: input, shape index: {}]
  %s1 = inlined_call_operand.hbm [shape: f32[32,64], index: 1, kind: input, shape index: {}]
  %s2 = inlined_call_operand.vmem [shape: f32[1,64], index: 2, kind: input, shape index: {}]
  %s3 = inlined_call_operand.hbm [shape: f32[16,64], index: 3, kind: output, shape index: {}]
  %s4 = sld [smem:[#allocation0]]
  $region38: #{fc_forward.1} parent=0
    _
  %s6 = ssub.s32 1, %s4
  %s7 = scalar_select 0, %s6, %s4
  $region1: #{fc_forward.1} parent=0
    #allocation2 [shape = 'u8[8192]{0}', space=vmem, size = 0x2000, scoped, tag = 'input window, operand 0, single buffered']
    #allocation3 [shape = 's32[1]{0}', space=sflag, size = 0x4, scoped, tag = 'scoped memory for fc_forward.1']
    #allocation4 [shape = 's32[1]{0}', space=sflag, size = 0x4, scoped, tag = 'scoped memory for fc_forward.1']
    #allocation5 [shape = 'u8[16384]{0}', space=vmem, size = 0x4000, scoped, tag = 'input window, operand 1, single buffered']
    #allocation6 [shape = 's32[1]{0}', space=sflag, size = 0x4, scoped, tag = 'scoped memory for fc_forward.1']
    #allocation7 [shape = 'u8[8192]{0}', space=vmem, size = 0x2000, scoped, tag = 'output window, operand 0, single buffered']
    %8 = vsyncpa [#allocation3], 0
    %9 = vsyncpa [#allocation6], 0
    %10 = vsyncpa [#allocation4], 0
    // Predicated region
    $region2: #{fc_forward.1} parent=1 // pred_check
      _
    $region3: #{fc_forward.1} parent=1 // pred_check_branch
      %12 = sbr.rel (0) target = $region5
    $region4: #{fc_forward.1} parent=1 // pred_region
      %s14 = ssub.s32 256, 256
      %15 = vsyncadd [#allocation3], %s14
      %s16 = sshll.u32 [#allocation2], 4
      %s17 = int_to_ptr.vmem [resolvable:$true] %s16
      %22 = dma.hbm_to_vmem [thread:$0]  %s0, 256, %s17, [#allocation3], 128, 128, 8
    $region5: #{fc_forward.1} parent=1 // pred_fallthru
      _
    // Predicated region
    $region6: #{fc_forward.1} parent=1 // pred_check
      _
    $region7: #{fc_forward.1} parent=1 // pred_check_branch
      %24 = sbr.rel (0) target = $region9
    $region8: #{fc_forward.1} parent=1 // pred_region
      %s26 = ssub.s32 512, 512
      %27 = vsyncadd [#allocation6], %s26
      %s28 = sshll.u32 [#allocation5], 4
      %s29 = int_to_ptr.vmem [resolvable:$true] %s28
      %34 = dma.hbm_to_vmem [thread:$0]  %s1, 512, %s29, [#allocation6], 128, 128, 8
    $region9: #{fc_forward.1} parent=1 // pred_fallthru
      _
    // Predicated region
    $region10: #{fc_forward.1} parent=1 // pred_check
      _
    $region11: #{fc_forward.1} parent=1 // pred_check_branch
      %36 = sbr.rel (0) target = $region13
    $region12: #{fc_forward.1} parent=1 // pred_region
      _
    $region13: #{fc_forward.1} parent=1 // pred_fallthru
      _
    // Predicated region
    $region14: #{fc_forward.1} parent=1 // pred_check
      _
    $region15: #{fc_forward.1} parent=1 // pred_check_branch
      %38 = sbr.rel (0) target = $region17
    $region16: #{fc_forward.1} parent=1 // pred_region
      %39 = dma.done [#allocation3], 256
    $region17: #{fc_forward.1} parent=1 // pred_fallthru
      _
    // Predicated region
    $region18: #{fc_forward.1} parent=1 // pred_check
      _
    $region19: #{fc_forward.1} parent=1 // pred_check_branch
      %41 = sbr.rel (0) target = $region21
    $region20: #{fc_forward.1} parent=1 // pred_region
      %42 = dma.done [#allocation6], 512
    $region21: #{fc_forward.1} parent=1 // pred_fallthru
      _
    %p43 = scmp.eq.s32.totalorder 0, 0
    // Predicated region
    $region22: #{fc_forward.1} parent=1 // pred_check
      %p44 = pneg %p43
    $region23: #{fc_forward.1} parent=1 // pred_check_branch
      %46 = sbr.rel (%p44) target = $region25
    $region24: #{fc_forward.1} parent=1 // pred_region
      %vm47 = vcmask 523264
      %48 = vst.msk [vmem:[#allocation7] sm:$0xff] %vm47, 0.0
      %49 = vst.msk [vmem:[#allocation7 + $0x8] sm:$0xff] %vm47, 0.0
    $region25: #{fc_forward.1} parent=1 // pred_fallthru
      _
    %v50 = vld [vmem:[#allocation7] sm:$0xff]
    %v51 = vld [vmem:[#allocation7 + $0x8] sm:$0xff]
    %v52 = vld [vmem:[#allocation2] sm:$0xff]
    %v53 = vld [vmem:[#allocation2 + $0x8] sm:$0xff]
    %v54 = vld [vmem:[#allocation5] sm:$0xff]
    %v55 = vld [vmem:[#allocation5 + $0x8] sm:$0xff]
    %v56 = vld [vmem:[#allocation5 + $0x10] sm:$0xff]
    %v57 = vld [vmem:[#allocation5 + $0x18] sm:$0xff]
    %vm58 = vcmask 261120
    %v60 = vsel %vm58, %v52, 0
    %v63 = vsel %vm58, %v53, 0
    %65 = vmatprep.subr.mxu0 0.0
    %66 = vmatpush1.msra.mxu0 %v54
    %67 = vmatprep.subr.mxu0 0.0
    %68 = vmatpush1.msra.mxu0 %v55
    %69 = vmatprep.subr.mxu0 0.0
    %70 = vmatpush1.msra.mxu0 %v56
    %71 = vmatprep.subr.mxu0 0.0
    %72 = vmatpush1.msra.mxu0 %v57
    %73 = vmatprep.subr.mxu0 0.0
    %74 = vmatpush1.msra.mxu0 0.0
    %75 = vmatprep.subr.mxu0 0.0
    %76 = vmatpush1.msra.mxu0 0.0
    %77 = vmatprep.subr.mxu0 0.0
    %78 = vmatpush1.msra.mxu0 0.0
    %79 = vmatprep.subr.mxu0 0.0
    %80 = vmatpush1.msra.mxu0 0.0
    %81 = vmatprep.subr.mxu0 0.0
    %82 = vmatpush1.msra.mxu0 0.0
    %83 = vmatprep.subr.mxu0 0.0
    %84 = vmatpush1.msra.mxu0 0.0
    %85 = vmatprep.subr.mxu0 0.0
    %86 = vmatpush1.msra.mxu0 0.0
    %87 = vmatprep.subr.mxu0 0.0
    %88 = vmatpush1.msra.mxu0 0.0
    %89 = vmatprep.subr.mxu0 0.0
    %90 = vmatpush1.msra.mxu0 0.0
    %91 = vmatprep.subr.mxu0 0.0
    %92 = vmatpush1.msra.mxu0 0.0
    %93 = vmatprep.subr.mxu0 0.0
    %94 = vmatpush1.msra.mxu0 0.0
    %95 = vmatprep.subr.mxu0 0.0
    %96 = vmatpush1.msra.mxu0 0.0
    %97 = vmatprep.subr.mxu0 0.0
    %98 = vmatpush1.msra.mxu0 0.0
    %99 = vmatprep.subr.mxu0 0.0
    %100 = vmatpush1.msra.mxu0 0.0
    %101 = vmatprep.subr.mxu0 0.0
    %102 = vmatpush1.msra.mxu0 0.0
    %103 = vmatprep.subr.mxu0 0.0
    %104 = vmatpush1.msra.mxu0 0.0
    %105 = vmatprep.subr.mxu0 0.0
    %106 = vmatpush1.msra.mxu0 0.0
    %107 = vmatprep.subr.mxu0 0.0
    %108 = vmatpush1.msra.mxu0 0.0
    %109 = vmatprep.subr.mxu0 0.0
    %110 = vmatpush1.msra.mxu0 0.0
    %111 = vmatprep.subr.mxu0 0.0
    %112 = vmatpush1.msra.mxu0 0.0
    %113 = vmatprep.subr.mxu0 0.0
    %114 = vmatpush1.msra.mxu0 0.0
    %115 = vmatprep.subr.mxu0 0.0
    %116 = vmatpush1.msra.mxu0 0.0
    %117 = vmatprep.subr.mxu0 0.0
    %118 = vmatpush1.msra.mxu0 0.0
    %119 = vmatprep.subr.mxu0 0.0
    %120 = vmatpush1.msra.mxu0 0.0
    %121 = vmatprep.subr.mxu0 0.0
    %122 = vmatpush1.msra.mxu0 0.0
    %123 = vmatprep.subr.mxu0 0.0
    %124 = vmatpush1.msra.mxu0 0.0
    %125 = vmatprep.subr.mxu0 0.0
    %126 = vmatpush1.msra.mxu0 0.0
    %127 = vmatprep.subr.mxu0 0.0
    %128 = vmatpush1.msra.mxu0 0.0
    %129 = vmatprep.mubr.f32.mxu0 0.0
    %130 = vmatmul.mubr.f32.gmra.mrb[0].mxu0 %v60
    %v131 = vpop.f32.mrb[0].mxu0
    %v132 = vadd.f32 0.0, %v131
    %v133 = vpop.f32.mrb[0].mxu0
    %134 = vmatprep.mubr.f32.mxu0 0.0
    %135 = vmatmul.mubr.f32.gmra.mrb[0].mxu0 %v63
    %v136 = vpop.f32.mrb[0].mxu0
    %v137 = vadd.f32 0.0, %v136
    %v138 = vpop.f32.mrb[0].mxu0
    %139 = vdwg.mxu0
    %v140 = vadd.f32 %v50, %v132
    %v141 = vadd.f32 %v51, %v137
    %vm142 = vcmask 523264
    %143 = vst.msk [vmem:[#allocation7] sm:$0xff] %vm142, %v140
    %144 = vst.msk [vmem:[#allocation7 + $0x8] sm:$0xff] %vm142, %v141
    // Predicated region
    $region26: #{fc_forward.1} parent=1 // pred_check
      %p145 = pneg %p43
    $region27: #{fc_forward.1} parent=1 // pred_check_branch
      %147 = sbr.rel (%p145) target = $region29
    $region28: #{fc_forward.1} parent=1 // pred_region
      %v148 = vld [vmem:[#allocation7] sm:$0xff]
      %v149 = vld [vmem:[#allocation7 + $0x8] sm:$0xff]
      %v150 = vld [vmem:[%s2] sm:$0x1]
      %v152 = vlaneseq
      %v153 = vshrl.u32 %v152, 7
      %v154 = vsub.s32 0, %v153
      %v155 = vrot.slane %v150, %v154
      %v157 = vadd.f32 %v148, %v155
      %v158 = vadd.f32 %v149, %v155
      %159 = vst.msk [vmem:[#allocation7] sm:$0xff] %vm142, %v157
      %160 = vst.msk [vmem:[#allocation7 + $0x8] sm:$0xff] %vm142, %v158
    $region29: #{fc_forward.1} parent=1 // pred_fallthru
      _
    // Predicated region
    $region30: #{fc_forward.1} parent=1 // pred_check
      _
    $region31: #{fc_forward.1} parent=1 // pred_check_branch
      %162 = sbr.rel (0) target = $region33
    $region32: #{fc_forward.1} parent=1 // pred_region
      %s164 = ssub.s32 256, 256
      %165 = vsyncadd [#allocation4], %s164
      %s166 = sshll.u32 [#allocation7], 4
      %s167 = int_to_ptr.vmem [resolvable:$true] %s166
      %172 = dma.vmem_to_hbm [thread:$0]  %s167, 256, %s3, [#allocation4], 128, 128, 8
    $region33: #{fc_forward.1} parent=1 // pred_fallthru
      _
    // Predicated region
    $region34: #{fc_forward.1} parent=1 // pred_check
      _
    $region35: #{fc_forward.1} parent=1 // pred_check_branch
      %174 = sbr.rel (0) target = $region37
    $region36: #{fc_forward.1} parent=1 // pred_region
      %175 = dma.done [#allocation4], 256
    $region37: #{fc_forward.1} parent=1 // pred_fallthru
      _
    %176 = vsyncpa [#allocation3], 1
    %177 = vsyncpa [#allocation6], 1
    %178 = vsyncpa [#allocation4], 1

</llo_original>
